<compile_context>
chip_gen: v7x
topology: tpu7x:2x2x1
jax: 0.10.0
libtpu: 0.0.40
codegen_flags: <defaults>
</compile_context>

<pallas_src>
import functools

import jax
import jax.numpy as jnp
from jax.experimental import pallas as pl
from jax.experimental.pallas import tpu as pltpu

LANE = 128
BF16_SUBLANE = 16  # bf16 packs 16 rows per vreg sublane group


def _round_up(n: int, m: int) -> int:
    return ((n + m - 1) // m) * m


def _padded_width(n: int) -> int:
    # Lane-dense padding. Dims already >128 are rounded to 256 so a single
    # pass fills the 256x256 MXU on v6e/v7x; tiny dims stay at 128 multiples
    # (ideal for v5e's 128x128 MXU and minimal padding for small models).
    return _round_up(n, 256) if n > 128 else _round_up(n, LANE)


def _mlp_kernel(*refs, num_layers: int):
    """Fused MLP over one batch tile. Activations never leave VMEM.

    refs = (x_ref, w0, b0, w1, b1, ..., o_ref)
      x_ref : [TB, input_dim]  bf16
      w_l   : [din_l, dout_l]  bf16 (zero-padded, VMEM-resident)
      b_l   : [1, dout_l]      f32
      o_ref : [TB, out_p]      f32  (padded columns are exactly zero)
    """
    x_ref = refs[0]
    o_ref = refs[1 + 2 * num_layers]

    h = x_ref[...]  # bf16
    for l in range(num_layers):  # static unroll over layers
        w_ref = refs[1 + 2 * l]
        b_ref = refs[2 + 2 * l]
        y = jnp.dot(h, w_ref[...], preferred_element_type=jnp.float32) + b_ref[...]
        if l < num_layers - 1:
            # ReLU on all but the output layer; next matmul input in bf16.
            h = jnp.maximum(y, 0.0).astype(jnp.bfloat16)
        else:
            h = y  # final layer output stays f32
    o_ref[...] = h


def _const_spec(shape, mode):
    """BlockSpec for a grid-invariant (VMEM-resident) operand."""
    idx = lambda i: (0,) * len(shape)
    if mode is None:
        return pl.BlockSpec(shape, idx)
    return pl.BlockSpec(shape, idx, pipeline_mode=mode)


def _mlp_forward(x, params, *, input_dim, out_features, out_p, num_layers,
                 batch_block, single_buffer_weights):
    """Run the fused kernel over a batch-tiled grid, slice real outputs."""
    x = x.reshape(-1, input_dim).astype(jnp.bfloat16)  # bf16 streaming: half the input bytes
    B = x.shape[0]

    if B >= batch_block:
        tb = batch_block
    else:
        # Aim for >=2 grid steps so ("parallel",) can shard across both TCs on
        # v7x; multiples of 16 keep bf16 sublane packing clean.
        tb = max(BF16_SUBLANE, _round_up(-(-B // 2), BF16_SUBLANE))
    grid_b = -(-B // tb)  # == pl.cdiv(B, tb); last tile may be partial (masked)

    # Review: Buffered(1) on the grid-invariant weight/bias blocks halves their
    # resident VMEM. Only enabled when the stack is big enough to matter.
    wmode = pl.Buffered(1) if single_buffer_weights else None

    in_specs = [pl.BlockSpec((tb, input_dim), lambda i: (i, 0))]
    flat_params = []
    for (w, b) in params:
        in_specs.append(_const_spec(w.shape, wmode))
        in_specs.append(_const_spec(b.shape, wmode))
        flat_params += [w, b]

    # ---- explicit VMEM budget (v7x only has 64 MiB / TC) -------------------
    n_wbuf = 1 if single_buffer_weights else 2
    param_bytes = sum(w.size * 2 + b.size * 4 for (w, b) in params) * n_wbuf
    widest = max(w.shape[1] for (w, _) in params)
    io_bytes = 2 * tb * input_dim * 2 + 2 * tb * out_p * 4   # double-buffered x / y tiles
    tmp_bytes = tb * widest * 12                              # live layer temporaries
    vmem_limit = min(max(2 * (param_bytes + io_bytes + tmp_bytes) + (4 << 20), 32 << 20),
                     120 << 20)
    # TODO(synk): if param_bytes alone approaches ~48 MiB (v7x), stop keeping the
    # whole weight stack resident and add a grid axis over layers / output tiles.

    # ---- advisory cost estimate for the XLA scheduler ----------------------
    flops = 2 * grid_b * tb * sum(w.shape[0] * w.shape[1] for (w, _) in params)
    bytes_accessed = (B * input_dim * 2 + B * out_p * 4
                      + sum(w.size * 2 + b.size * 4 for (w, b) in params))
    cost = pl.CostEstimate(flops=flops, transcendentals=0,
                           bytes_accessed=bytes_accessed)

    y = pl.pallas_call(
        functools.partial(_mlp_kernel, num_layers=num_layers),
        out_shape=jax.ShapeDtypeStruct((B, out_p), jnp.float32),
        grid_spec=pltpu.PrefetchScalarGridSpec(
            num_scalar_prefetch=0,
            grid=(grid_b,),
            in_specs=in_specs,
            out_specs=pl.BlockSpec((tb, out_p), lambda i: (i, 0)),
        ),
        compiler_params=pltpu.CompilerParams(
            dimension_semantics=("parallel",),
            vmem_limit_bytes=vmem_limit),
        cost_estimate=cost,
    )(x, *flat_params)

    return y[:, :out_features]


class DNNRegressorPallas:
    """JAX/Pallas re-implementation of DNNRegressor.forward (inference only)."""

    def __init__(self, input_dim, hidden_dim, output_dim, hidden_depth,
                 hetero_noise_est, key, *, batch_block=2048,
                 single_buffer_weights=None):
        self.input_dim = input_dim
        self.output_dim = output_dim
        self.hetero_noise_est = hetero_noise_est
        out_features = 2 * output_dim if hetero_noise_est else output_dim
        self.out_features = out_features

        dims = [(input_dim, hidden_dim)]
        dims += [(hidden_dim, hidden_dim)] * hidden_depth
        dims += [(hidden_dim, out_features)]
        self.num_layers = len(dims)

        hid_p = _padded_width(hidden_dim)
        out_p = _padded_width(out_features)
        self.out_p = out_p

        self.params_f32 = []      # unpadded, for the pure-JAX reference
        params_padded = []
        for li, (din, dout) in enumerate(dims):
            key, kw, kb = jax.random.split(key, 3)
            # Deterministic init, same scale as torch's default U(-1/sqrt(din), 1/sqrt(din)).
            bound = float(din) ** -0.5
            w = jax.random.uniform(kw, (din, dout), jnp.float32, -bound, bound)
            b = jax.random.uniform(kb, (dout,), jnp.float32, -bound, bound)
            self.params_f32.append((w, b))

            # Per-layer padded shapes: rows padded only when the previous layer
            # produces a padded activation; columns padded lane-dense. Zero
            # padding keeps padded lanes exactly zero through bias + ReLU.
            din_p = input_dim if li == 0 else hid_p
            dout_p = out_p if li == self.num_layers - 1 else hid_p
            w_p = jnp.zeros((din_p, dout_p), jnp.float32).at[:din, :dout].set(w)
            b_p = jnp.zeros((1, dout_p), jnp.float32).at[0, :dout].set(b)
            params_padded.append((w_p.astype(jnp.bfloat16), b_p))
        self.params_padded = tuple(params_padded)

        if single_buffer_weights is None:
            # Only bother single-buffering when the resident stack is big enough
            # for the 2x VMEM saving to matter (review: irrelevant at tiny DP).
            w_bytes = sum(w.size * 2 for (w, _) in self.params_padded)
            single_buffer_weights = w_bytes >= (8 << 20)

        self._fwd = jax.jit(functools.partial(
            _mlp_forward,
            input_dim=input_dim,
            out_features=out_features,
            out_p=out_p,
            num_layers=self.num_layers,
            batch_block=batch_block,
            single_buffer_weights=single_buffer_weights,
        ))

    def __call__(self, x, sample=True):
        # The torch forward computes `mask = self.training or sample` but never
        # uses it (no dropout layers), so `sample` does not change the math.
        return self._fwd(x, self.params_padded)


def _reference_forward(model, x):
    """Pure-JAX reference with the same mixed precision as the kernel."""
    h = x.reshape(-1, model.input_dim).astype(jnp.bfloat16)
    n = len(model.params_f32)
    for l, (w, b) in enumerate(model.params_f32):
        y = jnp.dot(h, w.astype(jnp.bfloat16),
                    preferred_element_type=jnp.float32) + b
        if l < n - 1:
            h = jnp.maximum(y, 0.0).astype(jnp.bfloat16)
        else:
            h = y
    return h


if __name__ == "__main__":
    key = jax.random.PRNGKey(0)
    k_param, k_x = jax.random.split(key)

    input_dim = 16
    hidden_dim = 32
    output_dim = 4
    hidden_depth = 2
    hetero_noise_est = True   # output layer produces 2 * output_dim columns

    model = DNNRegressorPallas(input_dim, hidden_dim, output_dim,
                               hidden_depth, hetero_noise_est, k_param)

    # batch=50 exercises a 2-step grid with a partial (masked) edge tile.
    batch = 50
    x = jax.random.normal(k_x, (batch, input_dim), jnp.float32)

    y = jax.block_until_ready(model(x))

    y_ref = _reference_forward(model, x)
    assert y.shape == (batch, 2 * output_dim), y.shape
    assert jnp.allclose(y, y_ref, atol=1e-2, rtol=1e-2), "mismatch vs reference"

    print("KERNEL_OK")
</pallas_src>

<mosaic_0001>
module attributes {stable_mosaic.version = 11 : i64} {
  func.func @_mlp_kernel(%arg0: i32, %arg1: memref<32x16xbf16, #tpu.memory_space<vmem>>, %arg2: memref<16x128xbf16, #tpu.memory_space<vmem>>, %arg3: memref<1x128xf32, #tpu.memory_space<vmem>>, %arg4: memref<128x128xbf16, #tpu.memory_space<vmem>>, %arg5: memref<1x128xf32, #tpu.memory_space<vmem>>, %arg6: memref<128x128xbf16, #tpu.memory_space<vmem>>, %arg7: memref<1x128xf32, #tpu.memory_space<vmem>>, %arg8: memref<128x128xbf16, #tpu.memory_space<vmem>>, %arg9: memref<1x128xf32, #tpu.memory_space<vmem>>, %arg10: memref<32x128xf32, #tpu.memory_space<vmem>>) attributes {dimension_semantics = [#tpu.dimension_semantics<parallel>], iteration_bounds = array<i64: 2>, scalar_prefetch = 0 : i64, scratch_operands = 0 : i64, tpu.core_type = #tpu.core_type<tc>, window_params = [{transform_indices = @transform_0, window_bounds = array<i64: 32, 16>}, {pipeline_mode = #tpu.pipeline_mode<synchronous>, transform_indices = @transform_1, window_bounds = array<i64: 16, 128>}, {pipeline_mode = #tpu.pipeline_mode<synchronous>, transform_indices = @transform_2, window_bounds = array<i64: 1, 128>}, {pipeline_mode = #tpu.pipeline_mode<synchronous>, transform_indices = @transform_3, window_bounds = array<i64: 128, 128>}, {pipeline_mode = #tpu.pipeline_mode<synchronous>, transform_indices = @transform_4, window_bounds = array<i64: 1, 128>}, {pipeline_mode = #tpu.pipeline_mode<synchronous>, transform_indices = @transform_5, window_bounds = array<i64: 128, 128>}, {pipeline_mode = #tpu.pipeline_mode<synchronous>, transform_indices = @transform_6, window_bounds = array<i64: 1, 128>}, {pipeline_mode = #tpu.pipeline_mode<synchronous>, transform_indices = @transform_7, window_bounds = array<i64: 128, 128>}, {pipeline_mode = #tpu.pipeline_mode<synchronous>, transform_indices = @transform_8, window_bounds = array<i64: 1, 128>}, {transform_indices = @transform_9, window_bounds = array<i64: 32, 128>}]} {
    %c0 = arith.constant 0 : index
    %c0_0 = arith.constant 0 : index
    %0 = vector.load %arg1[%c0, %c0_0] : memref<32x16xbf16, #tpu.memory_space<vmem>>, vector<32x16xbf16>
    %c0_1 = arith.constant 0 : index
    %c0_2 = arith.constant 0 : index
    %1 = vector.load %arg2[%c0_1, %c0_2] : memref<16x128xbf16, #tpu.memory_space<vmem>>, vector<16x128xbf16>
    %cst = arith.constant dense<0.000000e+00> : vector<32x128xf32>
    %2 = tpu.matmul %0, %1, %cst {dimension_numbers = #tpu.dot_dimension_numbers<[1], [0], [0], [1], [0, 0, 1, 1], [], []>} : vector<32x16xbf16>, vector<16x128xbf16>, vector<32x128xf32> -> vector<32x128xf32>
    %c0_3 = arith.constant 0 : index
    %c0_4 = arith.constant 0 : index
    %3 = vector.load %arg3[%c0_3, %c0_4] : memref<1x128xf32, #tpu.memory_space<vmem>>, vector<1x128xf32>
    %4 = vector.broadcast %3 : vector<1x128xf32> to vector<32x128xf32>
    %5 = arith.addf %2, %4 : vector<32x128xf32>
    %cst_5 = arith.constant 0.000000e+00 : f32
    %6 = vector.broadcast %cst_5 : f32 to vector<32x128xf32>
    %7 = arith.maximumf %5, %6 : vector<32x128xf32>
    %8 = arith.truncf %7 : vector<32x128xf32> to vector<32x128xbf16>
    %c0_6 = arith.constant 0 : index
    %c0_7 = arith.constant 0 : index
    %9 = vector.load %arg4[%c0_6, %c0_7] : memref<128x128xbf16, #tpu.memory_space<vmem>>, vector<128x128xbf16>
    %cst_8 = arith.constant dense<0.000000e+00> : vector<32x128xf32>
    %10 = tpu.matmul %8, %9, %cst_8 {dimension_numbers = #tpu.dot_dimension_numbers<[1], [0], [0], [1], [0, 0, 1, 1], [], []>} : vector<32x128xbf16>, vector<128x128xbf16>, vector<32x128xf32> -> vector<32x128xf32>
    %c0_9 = arith.constant 0 : index
    %c0_10 = arith.constant 0 : index
    %11 = vector.load %arg5[%c0_9, %c0_10] : memref<1x128xf32, #tpu.memory_space<vmem>>, vector<1x128xf32>
    %12 = vector.broadcast %11 : vector<1x128xf32> to vector<32x128xf32>
    %13 = arith.addf %10, %12 : vector<32x128xf32>
    %cst_11 = arith.constant 0.000000e+00 : f32
    %14 = vector.broadcast %cst_11 : f32 to vector<32x128xf32>
    %15 = arith.maximumf %13, %14 : vector<32x128xf32>
    %16 = arith.truncf %15 : vector<32x128xf32> to vector<32x128xbf16>
    %c0_12 = arith.constant 0 : index
    %c0_13 = arith.constant 0 : index
    %17 = vector.load %arg6[%c0_12, %c0_13] : memref<128x128xbf16, #tpu.memory_space<vmem>>, vector<128x128xbf16>
    %cst_14 = arith.constant dense<0.000000e+00> : vector<32x128xf32>
    %18 = tpu.matmul %16, %17, %cst_14 {dimension_numbers = #tpu.dot_dimension_numbers<[1], [0], [0], [1], [0, 0, 1, 1], [], []>} : vector<32x128xbf16>, vector<128x128xbf16>, vector<32x128xf32> -> vector<32x128xf32>
    %c0_15 = arith.constant 0 : index
    %c0_16 = arith.constant 0 : index
    %19 = vector.load %arg7[%c0_15, %c0_16] : memref<1x128xf32, #tpu.memory_space<vmem>>, vector<1x128xf32>
    %20 = vector.broadcast %19 : vector<1x128xf32> to vector<32x128xf32>
    %21 = arith.addf %18, %20 : vector<32x128xf32>
    %cst_17 = arith.constant 0.000000e+00 : f32
    %22 = vector.broadcast %cst_17 : f32 to vector<32x128xf32>
    %23 = arith.maximumf %21, %22 : vector<32x128xf32>
    %24 = arith.truncf %23 : vector<32x128xf32> to vector<32x128xbf16>
    %c0_18 = arith.constant 0 : index
    %c0_19 = arith.constant 0 : index
    %25 = vector.load %arg8[%c0_18, %c0_19] : memref<128x128xbf16, #tpu.memory_space<vmem>>, vector<128x128xbf16>
    %cst_20 = arith.constant dense<0.000000e+00> : vector<32x128xf32>
    %26 = tpu.matmul %24, %25, %cst_20 {dimension_numbers = #tpu.dot_dimension_numbers<[1], [0], [0], [1], [0, 0, 1, 1], [], []>} : vector<32x128xbf16>, vector<128x128xbf16>, vector<32x128xf32> -> vector<32x128xf32>
    %c0_21 = arith.constant 0 : index
    %c0_22 = arith.constant 0 : index
    %27 = vector.load %arg9[%c0_21, %c0_22] : memref<1x128xf32, #tpu.memory_space<vmem>>, vector<1x128xf32>
    %28 = vector.broadcast %27 : vector<1x128xf32> to vector<32x128xf32>
    %29 = arith.addf %26, %28 : vector<32x128xf32>
    %c0_23 = arith.constant 0 : index
    %c0_24 = arith.constant 0 : index
    %30 = vector.load %arg10[%c0_23, %c0_24] : memref<32x128xf32, #tpu.memory_space<vmem>>, vector<32x128xf32>
    tpu.vector_store %arg10[%c0_23, %c0_24], %29 {strides = array<i32>} : memref<32x128xf32, #tpu.memory_space<vmem>>, vector<32x128xf32>,
    return
  }
  func.func @transform_0(%arg0: i32) -> (i32, i32) {
    %c0_i32 = arith.constant 0 : i32
    %c0_i32_0 = arith.constant 0 : i32
    return %arg0, %c0_i32 : i32, i32
  }
  func.func @transform_1(%arg0: i32) -> (i32, i32) {
    %c0_i32 = arith.constant 0 : i32
    %c0_i32_0 = arith.constant 0 : i32
    %c0_i32_1 = arith.constant 0 : i32
    return %c0_i32, %c0_i32_0 : i32, i32
  }
  func.func @transform_2(%arg0: i32) -> (i32, i32) {
    %c0_i32 = arith.constant 0 : i32
    %c0_i32_0 = arith.constant 0 : i32
    %c0_i32_1 = arith.constant 0 : i32
    return %c0_i32, %c0_i32_0 : i32, i32
  }
  func.func @transform_3(%arg0: i32) -> (i32, i32) {
    %c0_i32 = arith.constant 0 : i32
    %c0_i32_0 = arith.constant 0 : i32
    %c0_i32_1 = arith.constant 0 : i32
    return %c0_i32, %c0_i32_0 : i32, i32
  }
  func.func @transform_4(%arg0: i32) -> (i32, i32) {
    %c0_i32 = arith.constant 0 : i32
    %c0_i32_0 = arith.constant 0 : i32
    %c0_i32_1 = arith.constant 0 : i32
    return %c0_i32, %c0_i32_0 : i32, i32
  }
  func.func @transform_5(%arg0: i32) -> (i32, i32) {
    %c0_i32 = arith.constant 0 : i32
    %c0_i32_0 = arith.constant 0 : i32
    %c0_i32_1 = arith.constant 0 : i32
    return %c0_i32, %c0_i32_0 : i32, i32
  }
  func.func @transform_6(%arg0: i32) -> (i32, i32) {
    %c0_i32 = arith.constant 0 : i32
    %c0_i32_0 = arith.constant 0 : i32
    %c0_i32_1 = arith.constant 0 : i32
    return %c0_i32, %c0_i32_0 : i32, i32
  }
  func.func @transform_7(%arg0: i32) -> (i32, i32) {
    %c0_i32 = arith.constant 0 : i32
    %c0_i32_0 = arith.constant 0 : i32
    %c0_i32_1 = arith.constant 0 : i32
    return %c0_i32, %c0_i32_0 : i32, i32
  }
  func.func @transform_8(%arg0: i32) -> (i32, i32) {
    %c0_i32 = arith.constant 0 : i32
    %c0_i32_0 = arith.constant 0 : i32
    %c0_i32_1 = arith.constant 0 : i32
    return %c0_i32, %c0_i32_0 : i32, i32
  }
  func.func @transform_9(%arg0: i32) -> (i32, i32) {
    %c0_i32 = arith.constant 0 : i32
    %c0_i32_0 = arith.constant 0 : i32
    return %arg0, %c0_i32 : i32, i32
  }
}

</mosaic_0001>

<llo_original>
// kernel: _mlp_forward.1
$region0: #{_mlp_forward.1}
  #allocation0 [shape = 'u32[]', space=smem, size = 0x4, offset = 0x4, fixed_abs, tag = 'smem constant byte address 0x4 - core index']
  #allocation1 [shape = 'u32[144,128]{1,0:T(1,128)}', space=vmem, size = 0x12000, scoped, tag = 'internal scratch']
  %s0 = inlined_call_operand.vmem [shape: bf16[50,16], index: 0, kind: input, shape index: {}]
  %s1 = inlined_call_operand.hbm [shape: bf16[16,128], index: 1, kind: input, shape index: {}]
  %s2 = inlined_call_operand.vmem [shape: f32[1,128], index: 2, kind: input, shape index: {}]
  %s3 = inlined_call_operand.vmem [shape: bf16[128,128], index: 3, kind: input, shape index: {}]
  %s4 = inlined_call_operand.vmem [shape: f32[1,128], index: 4, kind: input, shape index: {}]
  %s5 = inlined_call_operand.hbm [shape: bf16[128,128], index: 5, kind: input, shape index: {}]
  %s6 = inlined_call_operand.vmem [shape: f32[1,128], index: 6, kind: input, shape index: {}]
  %s7 = inlined_call_operand.hbm [shape: bf16[128,128], index: 7, kind: input, shape index: {}]
  %s8 = inlined_call_operand.vmem [shape: f32[1,128], index: 8, kind: input, shape index: {}]
  %s9 = inlined_call_operand.vmem [shape: f32[50,128], index: 9, kind: output, shape index: {}]
  %s10 = sld [smem:[#allocation0]]
  $region129: #{_mlp_forward.1} parent=0
    _
  %s12 = ssub.s32 1, %s10
  %s13 = scalar_select 0, %s12, %s10
  $region1: #{_mlp_forward.1} parent=0
    #allocation2 [shape = 'u8[4096]{0}', space=vmem, size = 0x1000, scoped, tag = 'input window, operand 1, single buffered']
    #allocation3 [shape = 's32[2]{0}', space=sflag, size = 0x8, scoped, tag = 'scoped memory for _mlp_forward.1']
    #allocation4 [shape = 'u8[32768]{0}', space=vmem, size = 0x8000, scoped, tag = 'input window, operand 5, single buffered']
    #allocation5 [shape = 's32[1]{0}', space=sflag, size = 0x4, scoped, tag = 'scoped memory for _mlp_forward.1']
    #allocation6 [shape = 'u8[32768]{0}', space=vmem, size = 0x8000, scoped, tag = 'input window, operand 7, single buffered']
    #allocation7 [shape = 'u8[32768]{0}', space=vmem, size = 0x8000, scoped, tag = 'output window, operand 0']
    %14 = vsyncpa [#allocation3], 0
    %15 = vsyncpa [#allocation5], 0
    loop: start=0, step=1, limit=4
    $region2: #{_mlp_forward.1} parent=1 // loop_pre_header
      _
    $region3: #{_mlp_forward.1} parent=1 // loop_header
      %s17 = sphi 0, %s21
      %p18 = scmp.ge.s32.totalorder %s17, 4
      %s27 = sphi 0, %s29
      %s30 = sphi 0, %s27
      %s31 = sphi 0, %s30
      %s47 = sphi 0, %s31
      %s51 = sphi 0, %s51
      %s53 = sphi 0, %s51
      %s54 = sphi 0, %s53
      %s68 = sphi 0, %s54
      %s72 = sphi 0, %s72
      %s74 = sphi 0, %s72
      %s75 = sphi 0, %s74
      %s89 = sphi 0, %s75
      %s93 = sphi 0, %s93
      %s95 = sphi 0, %s93
      %s96 = sphi 0, %s95
      %s110 = sphi 0, %s96
      %s114 = sphi 0, %s114
      %s116 = sphi 0, %s114
      %s117 = sphi 0, %s116
      %s131 = sphi 0, %s117
      %s135 = sphi 0, %s135
      %s137 = sphi 0, %s135
      %s138 = sphi 0, %s137
      %s152 = sphi 0, %s138
      %s156 = sphi 0, %s156
      %s158 = sphi 0, %s156
      %s159 = sphi 0, %s158
      %s173 = sphi 0, %s159
      %s177 = sphi 0, %s177
      %s179 = sphi 0, %s177
      %s180 = sphi 0, %s179
      %s194 = sphi 0, %s180
      %s198 = sphi 0, %s198
      %s200 = sphi 0, %s198
      %s201 = sphi 0, %s200
      %s215 = sphi 0, %s201
      %s221 = sphi 0, %s223
      %s224 = sphi 0, %s221
      %s225 = sphi 0, %s224
      %s241 = sphi 0, %s225
    $region4: #{_mlp_forward.1} parent=1 // loop_header_branch
      %20 = sbr.rel (%p18) target = $region8
    $region5: #{_mlp_forward.1} parent=1 // loop_body
      %s22 = ssub.s32 %s17, 1
      %s23 = ssub.s32 %s17, 2
      %s24 = sadd.s32 %s17, 1
      %s25 = ssub.s32 %s17, %s24
      %p26 = scmp.eq.s32.totalorder %s25, 0
      %s28 = sadd.s32 %s27, 1
      %s29 = scalar_select %p26, %s27, %s28
      %p32 = pneg %p26
      %p33 = scmp.eq.s32.totalorder %s17, 1
      %p34 = por %p32, %p33
      %p35 = scmp.ne.s32.totalorder %s27, %s30
      %p36 = scmp.eq.s32.totalorder %s17, 0
      %p37 = por %p35, %p36
      %p38 = scmp.ne.s32.totalorder %s27, %s30
      %p39 = scmp.eq.s32.totalorder %s22, 1
      %p40 = por %p38, %p39
      %p41 = scmp.ne.s32.totalorder %s30, %s31
      %p42 = scmp.eq.s32.totalorder %s22, 0
      %p43 = por %p41, %p42
      %p44 = scmp.ne.s32.totalorder %s30, %s31
      %p45 = scmp.eq.s32.totalorder %s23, 1
      %p46 = por %p44, %p45
      %p48 = scmp.ne.s32.totalorder %s31, %s47
      %p49 = scmp.eq.s32.totalorder %s23, 0
      %p50 = por %p48, %p49
      %s52 = sadd.s32 %s51, 1
      %p55 = scmp.eq.s32.totalorder %s17, 1
      %p56 = scmp.ne.s32.totalorder %s51, %s53
      %p57 = scmp.eq.s32.totalorder %s17, 0
      %p58 = por %p56, %p57
      %p59 = scmp.ne.s32.totalorder %s51, %s53
      %p60 = scmp.eq.s32.totalorder %s22, 1
      %p61 = por %p59, %p60
      %p62 = scmp.ne.s32.totalorder %s53, %s54
      %p63 = scmp.eq.s32.totalorder %s22, 0
      %p64 = por %p62, %p63
      %p65 = scmp.ne.s32.totalorder %s53, %s54
      %p66 = scmp.eq.s32.totalorder %s23, 1
      %p67 = por %p65, %p66
      %p69 = scmp.ne.s32.totalorder %s54, %s68
      %p70 = scmp.eq.s32.totalorder %s23, 0
      %p71 = por %p69, %p70
      %s73 = sadd.s32 %s72, 1
      %p76 = scmp.eq.s32.totalorder %s17, 1
      %p77 = scmp.ne.s32.totalorder %s72, %s74
      %p78 = scmp.eq.s32.totalorder %s17, 0
      %p79 = por %p77, %p78
      %p80 = scmp.ne.s32.totalorder %s72, %s74
      %p81 = scmp.eq.s32.totalorder %s22, 1
      %p82 = por %p80, %p81
      %p83 = scmp.ne.s32.totalorder %s74, %s75
      %p84 = scmp.eq.s32.totalorder %s22, 0
      %p85 = por %p83, %p84
      %p86 = scmp.ne.s32.totalorder %s74, %s75
      %p87 = scmp.eq.s32.totalorder %s23, 1
      %p88 = por %p86, %p87
      %p90 = scmp.ne.s32.totalorder %s75, %s89
      %p91 = scmp.eq.s32.totalorder %s23, 0
      %p92 = por %p90, %p91
      %s94 = sadd.s32 %s93, 1
      %p97 = scmp.eq.s32.totalorder %s17, 1
      %p98 = scmp.ne.s32.totalorder %s93, %s95
      %p99 = scmp.eq.s32.totalorder %s17, 0
      %p100 = por %p98, %p99
      %p101 = scmp.ne.s32.totalorder %s93, %s95
      %p102 = scmp.eq.s32.totalorder %s22, 1
      %p103 = por %p101, %p102
      %p104 = scmp.ne.s32.totalorder %s95, %s96
      %p105 = scmp.eq.s32.totalorder %s22, 0
      %p106 = por %p104, %p105
      %p107 = scmp.ne.s32.totalorder %s95, %s96
      %p108 = scmp.eq.s32.totalorder %s23, 1
      %p109 = por %p107, %p108
      %p111 = scmp.ne.s32.totalorder %s96, %s110
      %p112 = scmp.eq.s32.totalorder %s23, 0
      %p113 = por %p111, %p112
      %s115 = sadd.s32 %s114, 1
      %p118 = scmp.eq.s32.totalorder %s17, 1
      %p119 = scmp.ne.s32.totalorder %s114, %s116
      %p120 = scmp.eq.s32.totalorder %s17, 0
      %p121 = por %p119, %p120
      %p122 = scmp.ne.s32.totalorder %s114, %s116
      %p123 = scmp.eq.s32.totalorder %s22, 1
      %p124 = por %p122, %p123
      %p125 = scmp.ne.s32.totalorder %s116, %s117
      %p126 = scmp.eq.s32.totalorder %s22, 0
      %p127 = por %p125, %p126
      %p128 = scmp.ne.s32.totalorder %s116, %s117
      %p129 = scmp.eq.s32.totalorder %s23, 1
      %p130 = por %p128, %p129
      %p132 = scmp.ne.s32.totalorder %s117, %s131
      %p133 = scmp.eq.s32.totalorder %s23, 0
      %p134 = por %p132, %p133
      %s136 = sadd.s32 %s135, 1
      %p139 = scmp.eq.s32.totalorder %s17, 1
      %p140 = scmp.ne.s32.totalorder %s135, %s137
      %p141 = scmp.eq.s32.totalorder %s17, 0
      %p142 = por %p140, %p141
      %p143 = scmp.ne.s32.totalorder %s135, %s137
      %p144 = scmp.eq.s32.totalorder %s22, 1
      %p145 = por %p143, %p144
      %p146 = scmp.ne.s32.totalorder %s137, %s138
      %p147 = scmp.eq.s32.totalorder %s22, 0
      %p148 = por %p146, %p147
      %p149 = scmp.ne.s32.totalorder %s137, %s138
      %p150 = scmp.eq.s32.totalorder %s23, 1
      %p151 = por %p149, %p150
      %p153 = scmp.ne.s32.totalorder %s138, %s152
      %p154 = scmp.eq.s32.totalorder %s23, 0
      %p155 = por %p153, %p154
      %s157 = sadd.s32 %s156, 1
      %p160 = scmp.eq.s32.totalorder %s17, 1
      %p161 = scmp.ne.s32.totalorder %s156, %s158
      %p162 = scmp.eq.s32.totalorder %s17, 0
      %p163 = por %p161, %p162
      %p164 = scmp.ne.s32.totalorder %s156, %s158
      %p165 = scmp.eq.s32.totalorder %s22, 1
      %p166 = por %p164, %p165
      %p167 = scmp.ne.s32.totalorder %s158, %s159
      %p168 = scmp.eq.s32.totalorder %s22, 0
      %p169 = por %p167, %p168
      %p170 = scmp.ne.s32.totalorder %s158, %s159
      %p171 = scmp.eq.s32.totalorder %s23, 1
      %p172 = por %p170, %p171
      %p174 = scmp.ne.s32.totalorder %s159, %s173
      %p175 = scmp.eq.s32.totalorder %s23, 0
      %p176 = por %p174, %p175
      %s178 = sadd.s32 %s177, 1
      %p181 = scmp.eq.s32.totalorder %s17, 1
      %p182 = scmp.ne.s32.totalorder %s177, %s179
      %p183 = scmp.eq.s32.totalorder %s17, 0
      %p184 = por %p182, %p183
      %p185 = scmp.ne.s32.totalorder %s177, %s179
      %p186 = scmp.eq.s32.totalorder %s22, 1
      %p187 = por %p185, %p186
      %p188 = scmp.ne.s32.totalorder %s179, %s180
      %p189 = scmp.eq.s32.totalorder %s22, 0
      %p190 = por %p188, %p189
      %p191 = scmp.ne.s32.totalorder %s179, %s180
      %p192 = scmp.eq.s32.totalorder %s23, 1
      %p193 = por %p191, %p192
      %p195 = scmp.ne.s32.totalorder %s180, %s194
      %p196 = scmp.eq.s32.totalorder %s23, 0
      %p197 = por %p195, %p196
      %s199 = sadd.s32 %s198, 1
      %p202 = scmp.eq.s32.totalorder %s17, 1
      %p203 = scmp.ne.s32.totalorder %s198, %s200
      %p204 = scmp.eq.s32.totalorder %s17, 0
      %p205 = por %p203, %p204
      %p206 = scmp.ne.s32.totalorder %s198, %s200
      %p207 = scmp.eq.s32.totalorder %s22, 1
      %p208 = por %p206, %p207
      %p209 = scmp.ne.s32.totalorder %s200, %s201
      %p210 = scmp.eq.s32.totalorder %s22, 0
      %p211 = por %p209, %p210
      %p212 = scmp.ne.s32.totalorder %s200, %s201
      %p213 = scmp.eq.s32.totalorder %s23, 1
      %p214 = por %p212, %p213
      %p216 = scmp.ne.s32.totalorder %s201, %s215
      %p217 = scmp.eq.s32.totalorder %s23, 0
      %p218 = por %p216, %p217
      %s219 = ssub.s32 %s17, %s24
      %p220 = scmp.eq.s32.totalorder %s219, 0
      %s222 = sadd.s32 %s221, 1
      %s223 = scalar_select %p220, %s221, %s222
      %p226 = pneg %p220
      %p227 = scmp.eq.s32.totalorder %s17, 1
      %p228 = por %p226, %p227
      %p229 = scmp.ne.s32.totalorder %s221, %s224
      %p230 = scmp.eq.s32.totalorder %s17, 0
      %p231 = por %p229, %p230
      %p232 = scmp.ne.s32.totalorder %s221, %s224
      %p233 = scmp.eq.s32.totalorder %s22, 1
      %p234 = por %p232, %p233
      %p235 = scmp.ne.s32.totalorder %s224, %s225
      %p236 = scmp.eq.s32.totalorder %s22, 0
      %p237 = por %p235, %p236
      %p238 = scmp.ne.s32.totalorder %s224, %s225
      %p239 = scmp.eq.s32.totalorder %s23, 1
      %p240 = por %p238, %p239
      %p242 = scmp.ne.s32.totalorder %s225, %s241
      %p243 = scmp.eq.s32.totalorder %s23, 0
      %p244 = por %p242, %p243
      %p245 = scmp.le.s32.totalorder 1, %s17
      %p246 = scmp.lt.s32.totalorder %s17, 3
      %p247 = pnand %p245, %p246
      %p248 = pneg %p247
      // Predicated region
      $region9: #{_mlp_forward.1} parent=5 // pred_check
        _
      $region10: #{_mlp_forward.1} parent=5 // pred_check_branch
        %250 = sbr.rel (%p247) target = $region12
      $region11: #{_mlp_forward.1} parent=5 // pred_region
        %s251 = ssub.s32 %s17, 1
        // Predicated region
        $region13: #{_mlp_forward.1} parent=11 // pred_check
          %p252 = pneg %p64
        $region14: #{_mlp_forward.1} parent=11 // pred_check_branch
          %254 = sbr.rel (%p252) target = $region16
        $region15: #{_mlp_forward.1} parent=11 // pred_region
          %s256 = ssub.s32 128, 128
          %257 = vsyncadd [#allocation3], %s256
          %s258 = sshll.u32 [#allocation2], 4
          %s259 = int_to_ptr.vmem [resolvable:$true] %s258
          %264 = dma.hbm_to_vmem [thread:$0]  %s1, 128, %s259, [#allocation3], 64, 64, 4
        $region16: #{_mlp_forward.1} parent=11 // pred_fallthru
          _
        // Predicated region
        $region17: #{_mlp_forward.1} parent=11 // pred_check
          %p265 = pneg %p85
        $region18: #{_mlp_forward.1} parent=11 // pred_check_branch
          %267 = sbr.rel (%p265) target = $region20
        $region19: #{_mlp_forward.1} parent=11 // pred_region
          _
        $region20: #{_mlp_forward.1} parent=11 // pred_fallthru
          _
        // Predicated region
        $region21: #{_mlp_forward.1} parent=11 // pred_check
          %p268 = pneg %p106
        $region22: #{_mlp_forward.1} parent=11 // pred_check_branch
          %270 = sbr.rel (%p268) target = $region24
        $region23: #{_mlp_forward.1} parent=11 // pred_region
          _
        $region24: #{_mlp_forward.1} parent=11 // pred_fallthru
          _
        // Predicated region
        $region25: #{_mlp_forward.1} parent=11 // pred_check
          %p271 = pneg %p127
        $region26: #{_mlp_forward.1} parent=11 // pred_check_branch
          %273 = sbr.rel (%p271) target = $region28
        $region27: #{_mlp_forward.1} parent=11 // pred_region
          _
        $region28: #{_mlp_forward.1} parent=11 // pred_fallthru
          _
        // Predicated region
        $region29: #{_mlp_forward.1} parent=11 // pred_check
          %p274 = pneg %p148
        $region30: #{_mlp_forward.1} parent=11 // pred_check_branch
          %276 = sbr.rel (%p274) target = $region32
        $region31: #{_mlp_forward.1} parent=11 // pred_region
          %s278 = ssub.s32 1024, 1024
          %279 = vsyncadd [#allocation5], %s278
          %s280 = sshll.u32 [#allocation4], 4
          %s281 = int_to_ptr.vmem [resolvable:$true] %s280
          %286 = dma.hbm_to_vmem [thread:$0]  %s5, 1024, %s281, [#allocation5], 64, 64, 4
        $region32: #{_mlp_forward.1} parent=11 // pred_fallthru
          _
        // Predicated region
        $region33: #{_mlp_forward.1} parent=11 // pred_check
          %p287 = pneg %p169
        $region34: #{_mlp_forward.1} parent=11 // pred_check_branch
          %289 = sbr.rel (%p287) target = $region36
        $region35: #{_mlp_forward.1} parent=11 // pred_region
          _
        $region36: #{_mlp_forward.1} parent=11 // pred_fallthru
          _
        // Predicated region
        $region37: #{_mlp_forward.1} parent=11 // pred_check
          %p290 = pneg %p190
        $region38: #{_mlp_forward.1} parent=11 // pred_check_branch
          %292 = sbr.rel (%p290) target = $region40
        $region39: #{_mlp_forward.1} parent=11 // pred_region
          %s294 = ssub.s32 1024, 1024
          %295 = vsyncadd [#allocation5], %s294
          %s296 = sshll.u32 [#allocation6], 4
          %s297 = int_to_ptr.vmem [resolvable:$true] %s296
          %302 = dma.hbm_to_vmem [thread:$0]  %s7, 1024, %s297, [#allocation5], 64, 64, 4
        $region40: #{_mlp_forward.1} parent=11 // pred_fallthru
          _
        // Predicated region
        $region41: #{_mlp_forward.1} parent=11 // pred_check
          %p303 = pneg %p211
        $region42: #{_mlp_forward.1} parent=11 // pred_check_branch
          %305 = sbr.rel (%p303) target = $region44
        $region43: #{_mlp_forward.1} parent=11 // pred_region
          _
        $region44: #{_mlp_forward.1} parent=11 // pred_fallthru
          _
      $region12: #{_mlp_forward.1} parent=5 // pred_fallthru
        _
      %p306 = scmp.lt.s32.totalorder %s17, 2
      // Predicated region
      $region45: #{_mlp_forward.1} parent=5 // pred_check
        %p307 = pneg %p306
      $region46: #{_mlp_forward.1} parent=5 // pred_check_branch
        %309 = sbr.rel (%p307) target = $region48
      $region47: #{_mlp_forward.1} parent=5 // pred_region
        // Predicated region
        $region49: #{_mlp_forward.1} parent=47 // pred_check
          %p310 = pneg %p37
        $region50: #{_mlp_forward.1} parent=47 // pred_check_branch
          %312 = sbr.rel (%p310) target = $region52
        $region51: #{_mlp_forward.1} parent=47 // pred_region
          %s313 = smul.u32 4, %s17
          %s314 = ssub.s32 7, %s313
          %p315 = scmp.lt.s32.totalorder %s314, 4
          %s316 = scalar_select %p315, %s314, 4
          %s317 = smul.u32 64, %s316
          %p318 = scmp.lt.s32.totalorder %s313, 6
          %s319 = scalar_select %p318, %s313, 6
          %s320 = smul.addr %s319, 4
          %s321 = scalar_lea.vmem %s0, %s320
          %s322 = smul.u32 4, %s17
          %s323 = ssub.s32 7, %s322
          %p324 = scmp.lt.s32.totalorder %s323, 4
          %s325 = scalar_select %p324, %s323, 4
          %s326 = smul.u32 64, %s325
        $region52: #{_mlp_forward.1} parent=47 // pred_fallthru
          _
      $region48: #{_mlp_forward.1} parent=5 // pred_fallthru
        _
      %p327 = scmp.le.s32.totalorder 1, %s17
      %p328 = scmp.lt.s32.totalorder %s17, 3
      %p329 = pnand %p327, %p328
      %p330 = pneg %p329
      // Predicated region
      $region53: #{_mlp_forward.1} parent=5 // pred_check
        _
      $region54: #{_mlp_forward.1} parent=5 // pred_check_branch
        %332 = sbr.rel (%p329) target = $region56
      $region55: #{_mlp_forward.1} parent=5 // pred_region
        %s333 = ssub.s32 %s17, 1
        // Predicated region
        $region57: #{_mlp_forward.1} parent=55 // pred_check
          %p334 = pneg %p64
        $region58: #{_mlp_forward.1} parent=55 // pred_check_branch
          %336 = sbr.rel (%p334) target = $region60
        $region59: #{_mlp_forward.1} parent=55 // pred_region
          %337 = dma.done [#allocation3], 128
        $region60: #{_mlp_forward.1} parent=55 // pred_fallthru
          _
        // Predicated region
        $region61: #{_mlp_forward.1} parent=55 // pred_check
          %p338 = pneg %p148
        $region62: #{_mlp_forward.1} parent=55 // pred_check_branch
          %340 = sbr.rel (%p338) target = $region64
        $region63: #{_mlp_forward.1} parent=55 // pred_region
          %341 = dma.done [#allocation5], 1024
        $region64: #{_mlp_forward.1} parent=55 // pred_fallthru
          _
        // Predicated region
        $region65: #{_mlp_forward.1} parent=55 // pred_check
          %p342 = pneg %p190
        $region66: #{_mlp_forward.1} parent=55 // pred_check_branch
          %344 = sbr.rel (%p342) target = $region68
        $region67: #{_mlp_forward.1} parent=55 // pred_region
          %345 = dma.done [#allocation5], 1024
        $region68: #{_mlp_forward.1} parent=55 // pred_fallthru
          _
        %s346 = smul.u32 4, %s22
        %s347 = ssub.s32 7, %s346
        %p348 = scmp.lt.s32.totalorder %s347, 4
        %s349 = scalar_select %p348, %s347, 4
        %s350 = smul.u32 64, %s349
        %p351 = scmp.lt.s32.totalorder %s346, 6
        %s352 = scalar_select %p351, %s346, 6
        %s353 = smul.addr %s352, 4
        %s354 = scalar_lea.vmem %s0, %s353
        %p355 = pneg %p43
        %p356 = pneg %p40
        %p357 = pneg %p64
        %p358 = pneg %p61
        %p359 = pneg %p85
        %p360 = pneg %p82
        %p361 = pneg %p106
        %p362 = pneg %p103
        %p363 = pneg %p127
        %p364 = pneg %p124
        %p365 = pneg %p148
        %p366 = pneg %p145
        %p367 = pneg %p169
        %p368 = pneg %p166
        %p369 = pneg %p190
        %p370 = pneg %p187
        %p371 = pneg %p211
        %p372 = pneg %p208
        %p373 = pneg %p237
        %p374 = pneg %p234
        %s375 = sand.u32 %s224, 1
        %s376 = sand.u32 %s224, 1
        %s377 = smul.addr %s376, 32
        %s378 = scalar_lea.vmem [#allocation7], %s377
        %s379 = smul.u32 4, %s22
        %s380 = ssub.s32 7, %s379
        %p381 = scmp.lt.s32.totalorder %s380, 4
        %s382 = scalar_select %p381, %s380, 4
        %s383 = smul.u32 64, %s382
        %p384 = scmp.lt.s32.totalorder %s379, 6
        %s385 = scalar_select %p384, %s379, 6
        %s386 = smul.addr %s385, 4
        %s387 = scalar_lea.vmem %s0, %s386
        %s388 = smul.u32 4, %s22
        %s389 = ssub.s32 7, %s388
        %p390 = scmp.lt.s32.totalorder %s389, 4
        %s391 = scalar_select %p390, %s389, 4
        %s392 = smul.u32 64, %s391
        %s393 = smul.u32 4, %s22
        %s394 = ssub.s32 7, %s393
        %p395 = scmp.lt.s32.totalorder %s394, 4
        %s396 = scalar_select %p395, %s394, 4
        %s397 = smul.u32 128, %s396
        %v399 = vld [vmem:[%s387] sm:$0xf]
        %v400 = vld [vmem:[%s387 + $0x4] sm:$0xf]
        %v401 = vld [vmem:[%s387 + $0x8] sm:$0xf]
        %v402 = vld [vmem:[%s387 + $0xc] sm:$0xf]
        %v403 = vld [vmem:[#allocation2] sm:$0xf]
        %v404 = vld [vmem:[#allocation2 + $0x4] sm:$0xf]
        %v405 = vld [vmem:[%s2] sm:$0x1]
        %v407 = vlaneseq
        %v408 = vshrl.u32 %v407, 7
        %v409 = vsub.s32 0, %v408
        %v410 = vrot.slane %v405, %v409
        %v416 = vunpack.c.l.b16 %v399
        %v417 = vunpack.c.l.b16 %v400
        %v418 = vunpack.c.l.b16 %v401
        %v419 = vunpack.c.l.b16 %v402
        %v420 = vpack.c.b16 %v417, %v416
        %v421 = vpack.c.b16 %v419, %v418
        %v424 = vunpack.c.l.b16 %v403
        %v425 = vunpack.c.l.b16 %v404
        %v426 = vpack.c.b16 %v425, %v424
        %vm428 = vcmask 130048
        %v430 = vsel %vm428, %v420, 0
        %v433 = vsel %vm428, %v421, 0
        %435 = vmatprep.subr.bf16.mxu0 0
        %436 = vmatpush1.bf16.msra.mxu0 %v426
        %437 = vmatprep.subr.bf16.mxu0 0
        %438 = vmatpush1.bf16.msra.mxu0 0
        %439 = vmatprep.subr.bf16.mxu0 0
        %440 = vmatpush1.bf16.msra.mxu0 0
        %441 = vmatprep.subr.bf16.mxu0 0
        %442 = vmatpush1.bf16.msra.mxu0 0
        %443 = vmatprep.subr.bf16.mxu0 0
        %444 = vmatpush1.bf16.msra.mxu0 0
        %445 = vmatprep.subr.bf16.mxu0 0
        %446 = vmatpush1.bf16.msra.mxu0 0
        %447 = vmatprep.subr.bf16.mxu0 0
        %448 = vmatpush1.bf16.msra.mxu0 0
        %449 = vmatprep.subr.bf16.mxu0 0
        %450 = vmatpush1.bf16.msra.mxu0 0
        %451 = vmatprep.subr.bf16.mxu0 0
        %452 = vmatpush1.bf16.msra.mxu0 0
        %453 = vmatprep.subr.bf16.mxu0 0
        %454 = vmatpush1.bf16.msra.mxu0 0
        %455 = vmatprep.subr.bf16.mxu0 0
        %456 = vmatpush1.bf16.msra.mxu0 0
        %457 = vmatprep.subr.bf16.mxu0 0
        %458 = vmatpush1.bf16.msra.mxu0 0
        %459 = vmatprep.subr.bf16.mxu0 0
        %460 = vmatpush1.bf16.msra.mxu0 0
        %461 = vmatprep.subr.bf16.mxu0 0
        %462 = vmatpush1.bf16.msra.mxu0 0
        %463 = vmatprep.subr.bf16.mxu0 0
        %464 = vmatpush1.bf16.msra.mxu0 0
        %465 = vmatprep.subr.bf16.mxu0 0
        %466 = vmatpush1.bf16.msra.mxu0 0
        %467 = vmatprep.mubr.bf16.mxu0 0
        %468 = vmatmul.mubr.bf16.gmra.mrb[0].mxu0 %v430
        %v469 = vpop.f32.mrb[0].mxu0
        %v470 = vadd.f32 %v410, %v469
        %v471 = vpop.f32.mrb[0].mxu0
        %v472 = vpop.f32.mrb[0].mxu0
        %v473 = vadd.f32 %v410, %v472
        %v474 = vpop.f32.mrb[0].mxu0
        %475 = vmatprep.mubr.bf16.mxu0 0
        %476 = vmatmul.mubr.bf16.gmra.mrb[0].mxu0 %v433
        %v477 = vpop.f32.mrb[0].mxu0
        %v478 = vadd.f32 %v410, %v477
        %v479 = vpop.f32.mrb[0].mxu0
        %v480 = vpop.f32.mrb[0].mxu0
        %v481 = vadd.f32 %v410, %v480
        %v482 = vpop.f32.mrb[0].mxu0
        %483 = vdwg.mxu0
        %v484 = vmax.f32 %v470, 0.0
        %v485 = vmax.f32 %v473, 0.0
        %v486 = vmax.f32 %v478, 0.0
        %v487 = vmax.f32 %v481, 0.0
        %v488 = vpack.c.bf16 %v485, %v484
        %v489 = vpack.c.bf16 %v487, %v486
        %v490 = vld [vmem:[%s3] sm:$0xf]
        %v491 = vld [vmem:[%s3 + $0x4] sm:$0xf]
        %v492 = vld [vmem:[%s3 + $0x8] sm:$0xf]
        %v493 = vld [vmem:[%s3 + $0xc] sm:$0xf]
        %v494 = vld [vmem:[%s3 + $0x10] sm:$0xf]
        %v495 = vld [vmem:[%s3 + $0x14] sm:$0xf]
        %v496 = vld [vmem:[%s3 + $0x18] sm:$0xf]
        %v497 = vld [vmem:[%s3 + $0x1c] sm:$0xf]
        %v498 = vld [vmem:[%s3 + $0x20] sm:$0xf]
        %v499 = vld [vmem:[%s3 + $0x24] sm:$0xf]
        %v500 = vld [vmem:[%s3 + $0x28] sm:$0xf]
        %v501 = vld [vmem:[%s3 + $0x2c] sm:$0xf]
        %v502 = vld [vmem:[%s3 + $0x30] sm:$0xf]
        %v503 = vld [vmem:[%s3 + $0x34] sm:$0xf]
        %v504 = vld [vmem:[%s3 + $0x38] sm:$0xf]
        %v505 = vld [vmem:[%s3 + $0x3c] sm:$0xf]
        %v506 = vld [vmem:[%s4] sm:$0x1]
        %v508 = vlaneseq
        %v509 = vshrl.u32 %v508, 7
        %v510 = vsub.s32 0, %v509
        %v511 = vrot.slane %v506, %v510
        %v529 = vunpack.c.l.b16 %v490
        %v530 = vunpack.c.l.b16 %v491
        %v531 = vunpack.c.l.b16 %v492
        %v532 = vunpack.c.l.b16 %v493
        %v533 = vunpack.c.l.b16 %v494
        %v534 = vunpack.c.l.b16 %v495
        %v535 = vunpack.c.l.b16 %v496
        %v536 = vunpack.c.l.b16 %v497
        %v537 = vunpack.c.l.b16 %v498
        %v538 = vunpack.c.l.b16 %v499
        %v539 = vunpack.c.l.b16 %v500
        %v540 = vunpack.c.l.b16 %v501
        %v541 = vunpack.c.l.b16 %v502
        %v542 = vunpack.c.l.b16 %v503
        %v543 = vunpack.c.l.b16 %v504
        %v544 = vunpack.c.l.b16 %v505
        %v545 = vpack.c.b16 %v530, %v529
        %v546 = vpack.c.b16 %v532, %v531
        %v547 = vpack.c.b16 %v534, %v533
        %v548 = vpack.c.b16 %v536, %v535
        %v549 = vpack.c.b16 %v538, %v537
        %v550 = vpack.c.b16 %v540, %v539
        %v551 = vpack.c.b16 %v542, %v541
        %v552 = vpack.c.b16 %v544, %v543
        %561 = vmatprep.subr.bf16.mxu0 0
        %562 = vmatpush1.bf16.msra.mxu0 %v545
        %563 = vmatprep.subr.bf16.mxu0 0
        %564 = vmatpush1.bf16.msra.mxu0 %v546
        %565 = vmatprep.subr.bf16.mxu0 0
        %566 = vmatpush1.bf16.msra.mxu0 %v547
        %567 = vmatprep.subr.bf16.mxu0 0
        %568 = vmatpush1.bf16.msra.mxu0 %v548
        %569 = vmatprep.subr.bf16.mxu0 0
        %570 = vmatpush1.bf16.msra.mxu0 %v549
        %571 = vmatprep.subr.bf16.mxu0 0
        %572 = vmatpush1.bf16.msra.mxu0 %v550
        %573 = vmatprep.subr.bf16.mxu0 0
        %574 = vmatpush1.bf16.msra.mxu0 %v551
        %575 = vmatprep.subr.bf16.mxu0 0
        %576 = vmatpush1.bf16.msra.mxu0 %v552
        %577 = vmatprep.subr.bf16.mxu0 0
        %578 = vmatpush1.bf16.msra.mxu0 0
        %579 = vmatprep.subr.bf16.mxu0 0
        %580 = vmatpush1.bf16.msra.mxu0 0
        %581 = vmatprep.subr.bf16.mxu0 0
        %582 = vmatpush1.bf16.msra.mxu0 0
        %583 = vmatprep.subr.bf16.mxu0 0
        %584 = vmatpush1.bf16.msra.mxu0 0
        %585 = vmatprep.subr.bf16.mxu0 0
        %586 = vmatpush1.bf16.msra.mxu0 0
        %587 = vmatprep.subr.bf16.mxu0 0
        %588 = vmatpush1.bf16.msra.mxu0 0
        %589 = vmatprep.subr.bf16.mxu0 0
        %590 = vmatpush1.bf16.msra.mxu0 0
        %591 = vmatprep.subr.bf16.mxu0 0
        %592 = vmatpush1.bf16.msra.mxu0 0
        %593 = vmatprep.mubr.bf16.mxu0 0
        %594 = vmatmul.mubr.bf16.gmra.mrb[0].mxu0 %v488
        %v595 = vpop.f32.mrb[0].mxu0
        %v596 = vadd.f32 %v511, %v595
        %v597 = vpop.f32.mrb[0].mxu0
        %v598 = vpop.f32.mrb[0].mxu0
        %v599 = vadd.f32 %v511, %v598
        %v600 = vpop.f32.mrb[0].mxu0
        %601 = vmatprep.mubr.bf16.mxu0 0
        %602 = vmatmul.mubr.bf16.gmra.mrb[0].mxu0 %v489
        %v603 = vpop.f32.mrb[0].mxu0
        %v604 = vadd.f32 %v511, %v603
        %v605 = vpop.f32.mrb[0].mxu0
        %v606 = vpop.f32.mrb[0].mxu0
        %v607 = vadd.f32 %v511, %v606
        %v608 = vpop.f32.mrb[0].mxu0
        %609 = vdwg.mxu0
        %v610 = vmax.f32 %v596, 0.0
        %v611 = vmax.f32 %v599, 0.0
        %v612 = vmax.f32 %v604, 0.0
        %v613 = vmax.f32 %v607, 0.0
        %v614 = vpack.c.bf16 %v611, %v610
        %v615 = vpack.c.bf16 %v613, %v612
        %v616 = vld [vmem:[#allocation4] sm:$0xf]
        %v617 = vld [vmem:[#allocation4 + $0x4] sm:$0xf]
        %v618 = vld [vmem:[#allocation4 + $0x8] sm:$0xf]
        %v619 = vld [vmem:[#allocation4 + $0xc] sm:$0xf]
        %v620 = vld [vmem:[#allocation4 + $0x10] sm:$0xf]
        %v621 = vld [vmem:[#allocation4 + $0x14] sm:$0xf]
        %v622 = vld [vmem:[#allocation4 + $0x18] sm:$0xf]
        %v623 = vld [vmem:[#allocation4 + $0x1c] sm:$0xf]
        %v624 = vld [vmem:[#allocation4 + $0x20] sm:$0xf]
        %v625 = vld [vmem:[#allocation4 + $0x24] sm:$0xf]
        %v626 = vld [vmem:[#allocation4 + $0x28] sm:$0xf]
        %v627 = vld [vmem:[#allocation4 + $0x2c] sm:$0xf]
        %v628 = vld [vmem:[#allocation4 + $0x30] sm:$0xf]
        %v629 = vld [vmem:[#allocation4 + $0x34] sm:$0xf]
        %v630 = vld [vmem:[#allocation4 + $0x38] sm:$0xf]
        %v631 = vld [vmem:[#allocation4 + $0x3c] sm:$0xf]
        %v632 = vld [vmem:[%s6] sm:$0x1]
        %v634 = vlaneseq
        %v635 = vshrl.u32 %v634, 7
        %v636 = vsub.s32 0, %v635
        %v637 = vrot.slane %v632, %v636
        %v655 = vunpack.c.l.b16 %v616
        %v656 = vunpack.c.l.b16 %v617
        %v657 = vunpack.c.l.b16 %v618
        %v658 = vunpack.c.l.b16 %v619
        %v659 = vunpack.c.l.b16 %v620
        %v660 = vunpack.c.l.b16 %v621
        %v661 = vunpack.c.l.b16 %v622
        %v662 = vunpack.c.l.b16 %v623
        %v663 = vunpack.c.l.b16 %v624
        %v664 = vunpack.c.l.b16 %v625
        %v665 = vunpack.c.l.b16 %v626
        %v666 = vunpack.c.l.b16 %v627
        %v667 = vunpack.c.l.b16 %v628
        %v668 = vunpack.c.l.b16 %v629
        %v669 = vunpack.c.l.b16 %v630
        %v670 = vunpack.c.l.b16 %v631
        %v671 = vpack.c.b16 %v656, %v655
        %v672 = vpack.c.b16 %v658, %v657
        %v673 = vpack.c.b16 %v660, %v659
        %v674 = vpack.c.b16 %v662, %v661
        %v675 = vpack.c.b16 %v664, %v663
        %v676 = vpack.c.b16 %v666, %v665
        %v677 = vpack.c.b16 %v668, %v667
        %v678 = vpack.c.b16 %v670, %v669
        %687 = vmatprep.subr.bf16.mxu0 0
        %688 = vmatpush1.bf16.msra.mxu0 %v671
        %689 = vmatprep.subr.bf16.mxu0 0
        %690 = vmatpush1.bf16.msra.mxu0 %v672
        %691 = vmatprep.subr.bf16.mxu0 0
        %692 = vmatpush1.bf16.msra.mxu0 %v673
        %693 = vmatprep.subr.bf16.mxu0 0
        %694 = vmatpush1.bf16.msra.mxu0 %v674
        %695 = vmatprep.subr.bf16.mxu0 0
        %696 = vmatpush1.bf16.msra.mxu0 %v675
        %697 = vmatprep.subr.bf16.mxu0 0
        %698 = vmatpush1.bf16.msra.mxu0 %v676
        %699 = vmatprep.subr.bf16.mxu0 0
        %700 = vmatpush1.bf16.msra.mxu0 %v677
        %701 = vmatprep.subr.bf16.mxu0 0
        %702 = vmatpush1.bf16.msra.mxu0 %v678
        %703 = vmatprep.subr.bf16.mxu0 0
        %704 = vmatpush1.bf16.msra.mxu0 0
        %705 = vmatprep.subr.bf16.mxu0 0
        %706 = vmatpush1.bf16.msra.mxu0 0
        %707 = vmatprep.subr.bf16.mxu0 0
        %708 = vmatpush1.bf16.msra.mxu0 0
        %709 = vmatprep.subr.bf16.mxu0 0
        %710 = vmatpush1.bf16.msra.mxu0 0
        %711 = vmatprep.subr.bf16.mxu0 0
        %712 = vmatpush1.bf16.msra.mxu0 0
        %713 = vmatprep.subr.bf16.mxu0 0
        %714 = vmatpush1.bf16.msra.mxu0 0
        %715 = vmatprep.subr.bf16.mxu0 0
        %716 = vmatpush1.bf16.msra.mxu0 0
        %717 = vmatprep.subr.bf16.mxu0 0
        %718 = vmatpush1.bf16.msra.mxu0 0
        %719 = vmatprep.mubr.bf16.mxu0 0
        %720 = vmatmul.mubr.bf16.gmra.mrb[0].mxu0 %v614
        %v721 = vpop.f32.mrb[0].mxu0
        %v722 = vadd.f32 %v637, %v721
        %v723 = vpop.f32.mrb[0].mxu0
        %v724 = vpop.f32.mrb[0].mxu0
        %v725 = vadd.f32 %v637, %v724
        %v726 = vpop.f32.mrb[0].mxu0
        %727 = vmatprep.mubr.bf16.mxu0 0
        %728 = vmatmul.mubr.bf16.gmra.mrb[0].mxu0 %v615
        %v729 = vpop.f32.mrb[0].mxu0
        %v730 = vadd.f32 %v637, %v729
        %v731 = vpop.f32.mrb[0].mxu0
        %v732 = vpop.f32.mrb[0].mxu0
        %v733 = vadd.f32 %v637, %v732
        %v734 = vpop.f32.mrb[0].mxu0
        %735 = vdwg.mxu0
        %v736 = vmax.f32 %v722, 0.0
        %v737 = vmax.f32 %v725, 0.0
        %v738 = vmax.f32 %v730, 0.0
        %v739 = vmax.f32 %v733, 0.0
        %v740 = vpack.c.bf16 %v737, %v736
        %v741 = vpack.c.bf16 %v739, %v738
        %v742 = vld [vmem:[#allocation6] sm:$0xf]
        %v743 = vld [vmem:[#allocation6 + $0x4] sm:$0xf]
        %v744 = vld [vmem:[#allocation6 + $0x8] sm:$0xf]
        %v745 = vld [vmem:[#allocation6 + $0xc] sm:$0xf]
        %v746 = vld [vmem:[#allocation6 + $0x10] sm:$0xf]
        %v747 = vld [vmem:[#allocation6 + $0x14] sm:$0xf]
        %v748 = vld [vmem:[#allocation6 + $0x18] sm:$0xf]
        %v749 = vld [vmem:[#allocation6 + $0x1c] sm:$0xf]
        %v750 = vld [vmem:[#allocation6 + $0x20] sm:$0xf]
        %v751 = vld [vmem:[#allocation6 + $0x24] sm:$0xf]
        %v752 = vld [vmem:[#allocation6 + $0x28] sm:$0xf]
        %v753 = vld [vmem:[#allocation6 + $0x2c] sm:$0xf]
        %v754 = vld [vmem:[#allocation6 + $0x30] sm:$0xf]
        %v755 = vld [vmem:[#allocation6 + $0x34] sm:$0xf]
        %v756 = vld [vmem:[#allocation6 + $0x38] sm:$0xf]
        %v757 = vld [vmem:[#allocation6 + $0x3c] sm:$0xf]
        %v758 = vld [vmem:[%s8] sm:$0x1]
        %v760 = vlaneseq
        %v761 = vshrl.u32 %v760, 7
        %v762 = vsub.s32 0, %v761
        %v763 = vrot.slane %v758, %v762
        %v781 = vunpack.c.l.b16 %v742
        %v782 = vunpack.c.l.b16 %v743
        %v783 = vunpack.c.l.b16 %v744
        %v784 = vunpack.c.l.b16 %v745
        %v785 = vunpack.c.l.b16 %v746
        %v786 = vunpack.c.l.b16 %v747
        %v787 = vunpack.c.l.b16 %v748
        %v788 = vunpack.c.l.b16 %v749
        %v789 = vunpack.c.l.b16 %v750
        %v790 = vunpack.c.l.b16 %v751
        %v791 = vunpack.c.l.b16 %v752
        %v792 = vunpack.c.l.b16 %v753
        %v793 = vunpack.c.l.b16 %v754
        %v794 = vunpack.c.l.b16 %v755
        %v795 = vunpack.c.l.b16 %v756
        %v796 = vunpack.c.l.b16 %v757
        %v797 = vpack.c.b16 %v782, %v781
        %v798 = vpack.c.b16 %v784, %v783
        %v799 = vpack.c.b16 %v786, %v785
        %v800 = vpack.c.b16 %v788, %v787
        %v801 = vpack.c.b16 %v790, %v789
        %v802 = vpack.c.b16 %v792, %v791
        %v803 = vpack.c.b16 %v794, %v793
        %v804 = vpack.c.b16 %v796, %v795
        %813 = vmatprep.subr.bf16.mxu0 0
        %814 = vmatpush1.bf16.msra.mxu0 %v797
        %815 = vmatprep.subr.bf16.mxu0 0
        %816 = vmatpush1.bf16.msra.mxu0 %v798
        %817 = vmatprep.subr.bf16.mxu0 0
        %818 = vmatpush1.bf16.msra.mxu0 %v799
        %819 = vmatprep.subr.bf16.mxu0 0
        %820 = vmatpush1.bf16.msra.mxu0 %v800
        %821 = vmatprep.subr.bf16.mxu0 0
        %822 = vmatpush1.bf16.msra.mxu0 %v801
        %823 = vmatprep.subr.bf16.mxu0 0
        %824 = vmatpush1.bf16.msra.mxu0 %v802
        %825 = vmatprep.subr.bf16.mxu0 0
        %826 = vmatpush1.bf16.msra.mxu0 %v803
        %827 = vmatprep.subr.bf16.mxu0 0
        %828 = vmatpush1.bf16.msra.mxu0 %v804
        %829 = vmatprep.subr.bf16.mxu0 0
        %830 = vmatpush1.bf16.msra.mxu0 0
        %831 = vmatprep.subr.bf16.mxu0 0
        %832 = vmatpush1.bf16.msra.mxu0 0
        %833 = vmatprep.subr.bf16.mxu0 0
        %834 = vmatpush1.bf16.msra.mxu0 0
        %835 = vmatprep.subr.bf16.mxu0 0
        %836 = vmatpush1.bf16.msra.mxu0 0
        %837 = vmatprep.subr.bf16.mxu0 0
        %838 = vmatpush1.bf16.msra.mxu0 0
        %839 = vmatprep.subr.bf16.mxu0 0
        %840 = vmatpush1.bf16.msra.mxu0 0
        %841 = vmatprep.subr.bf16.mxu0 0
        %842 = vmatpush1.bf16.msra.mxu0 0
        %843 = vmatprep.subr.bf16.mxu0 0
        %844 = vmatpush1.bf16.msra.mxu0 0
        %845 = vmatprep.mubr.bf16.mxu0 0
        %846 = vmatmul.mubr.bf16.gmra.mrb[0].mxu0 %v740
        %v847 = vpop.f32.mrb[0].mxu0
        %v848 = vadd.f32 %v763, %v847
        %v849 = vpop.f32.mrb[0].mxu0
        %v850 = vpop.f32.mrb[0].mxu0
        %v851 = vadd.f32 %v763, %v850
        %v852 = vpop.f32.mrb[0].mxu0
        %853 = vmatprep.mubr.bf16.mxu0 0
        %854 = vmatmul.mubr.bf16.gmra.mrb[0].mxu0 %v741
        %v855 = vpop.f32.mrb[0].mxu0
        %v856 = vadd.f32 %v763, %v855
        %v857 = vpop.f32.mrb[0].mxu0
        %v858 = vpop.f32.mrb[0].mxu0
        %v859 = vadd.f32 %v763, %v858
        %v860 = vpop.f32.mrb[0].mxu0
        %861 = vdwg.mxu0
        %862 = vst [vmem:[%s378] sm:$0xff] %v848
        %863 = vst [vmem:[%s378 + $0x8] sm:$0xff] %v851
        %864 = vst [vmem:[%s378 + $0x10] sm:$0xff] %v856
        %865 = vst [vmem:[%s378 + $0x18] sm:$0xff] %v859
        %s866 = sand.u32 %s224, 1
        %s867 = sand.u32 %s224, 1
        %s868 = smul.addr %s867, 32
        %s869 = scalar_lea.vmem [#allocation7], %s868
        // Predicated region
        $region69: #{_mlp_forward.1} parent=55 // pred_check
          %p870 = pneg %p234
        $region70: #{_mlp_forward.1} parent=55 // pred_check_branch
          %872 = sbr.rel (%p870) target = $region72
        $region71: #{_mlp_forward.1} parent=55 // pred_region
          %s873 = smul.u32 4, %s22
          %s874 = ssub.s32 7, %s873
          %p875 = scmp.lt.s32.totalorder %s874, 4
          %s876 = scalar_select %p875, %s874, 4
          %s877 = smul.u32 128, %s876
          %p878 = scmp.ne.s32.totalorder 0, %s877
          %s879 = smul.addr %s873, 8
          %s880 = scalar_lea.vmem %s9, %s879
          // Predicated region
          $region73: #{_mlp_forward.1} parent=71 // pred_check
            %p881 = pneg %p878
          $region74: #{_mlp_forward.1} parent=71 // pred_check_branch
            %883 = sbr.rel (%p881) target = $region76
          $region75: #{_mlp_forward.1} parent=71 // pred_region
            // Predicated region
            $region77: #{_mlp_forward.1} parent=75 // pred_check
              _
            $region78: #{_mlp_forward.1} parent=75 // pred_check_branch
              %885 = sbr.rel (0) target = $region80
            $region79: #{_mlp_forward.1} parent=75 // pred_region
              // Predicated region
              $region99: #{_mlp_forward.1} parent=79 // pred_check
                _
              $region100: #{_mlp_forward.1} parent=79 // pred_check_branch
                %940 = sbr.rel (0) target = $region102
              $region101: #{_mlp_forward.1} parent=79 // pred_region
                %s941 = sshrl.u32 %s876, 2
                // While loop
                $region103: #{_mlp_forward.1} parent=101 // loop_pre_header
                  _
                $region104: #{_mlp_forward.1} parent=101 // loop_header
                  %s943 = sphi 0, %s945
                  %p944 = scmp.ge.s32.totalorder %s943, %s941
                  %s948 = sphi 0, %s961
                  %s949 = sphi %s869, %s964
                  %s950 = sphi %s880, %s965
                $region105: #{_mlp_forward.1} parent=101 // loop_header_branch
                  %947 = sbr.rel (%p944) target = $region109
                $region106: #{_mlp_forward.1} parent=101 // loop_body
                  %v951 = vld [vmem:[%s949] sm:$0xff]
                  %952 = vst [vmem:[%s950] sm:$0xff] %v951
                  %v953 = vld [vmem:[%s949 + $0x8] sm:$0xff]
                  %954 = vst [vmem:[%s950 + $0x8] sm:$0xff] %v953
                  %v955 = vld [vmem:[%s949 + $0x10] sm:$0xff]
                  %956 = vst [vmem:[%s950 + $0x10] sm:$0xff] %v955
                  %v957 = vld [vmem:[%s949 + $0x18] sm:$0xff]
                  %958 = vst [vmem:[%s950 + $0x18] sm:$0xff] %v957
                  %s959 = sadd.s32 1, %s948
                  %p960 = scmp.ge.s32.totalorder %s959, %s941
                  %s961 = scalar_select %p960, 0, %s959
                  %s962 = smul.u32 %s961, 32
                  %s963 = smul.u32 %s961, 32
                  %s964 = scalar_lea.vmem %s869, %s962 [#allocation7]
                  %s965 = scalar_lea.vmem %s880, %s963
                $region107: #{_mlp_forward.1} parent=101 // loop_footer
                  %s945 = sadd.s32 %s943, 1
                $region108: #{_mlp_forward.1} parent=101 // loop_footer_branch
                  %942 = sbr.rel target = $region104
                $region109: #{_mlp_forward.1} parent=101 // loop_exit
                  _
                %s966 = sshrl.u32 %s876, 2
                %s967 = sand.u32 %s876, 3
                %s968 = smul.u32 %s966, 4
                %s969 = smul.u32 8, %s968
                %s970 = scalar_lea.vmem %s869, %s969 [#allocation7]
                %s971 = smul.u32 8, %s968
                %s972 = scalar_lea.vmem %s880, %s971
                // While loop
                $region110: #{_mlp_forward.1} parent=101 // loop_pre_header
                  _
                $region111: #{_mlp_forward.1} parent=101 // loop_header
                  %s974 = sphi 0, %s976
                  %p975 = scmp.ge.s32.totalorder %s974, %s967
                  %s979 = sphi 0, %s986
                  %s980 = sphi %s970, %s989
                  %s981 = sphi %s972, %s990
                $region112: #{_mlp_forward.1} parent=101 // loop_header_branch
                  %978 = sbr.rel (%p975) target = $region116
                $region113: #{_mlp_forward.1} parent=101 // loop_body
                  %v982 = vld [vmem:[%s980] sm:$0xff]
                  %983 = vst [vmem:[%s981] sm:$0xff] %v982
                  %s984 = sadd.s32 1, %s979
                  %p985 = scmp.ge.s32.totalorder %s984, %s967
                  %s986 = scalar_select %p985, 0, %s984
                  %s987 = smul.u32 %s986, 8
                  %s988 = smul.u32 %s986, 8
                  %s989 = scalar_lea.vmem %s970, %s987 [#allocation7]
                  %s990 = scalar_lea.vmem %s972, %s988
                $region114: #{_mlp_forward.1} parent=101 // loop_footer
                  %s976 = sadd.s32 %s974, 1
                $region115: #{_mlp_forward.1} parent=101 // loop_footer_branch
                  %973 = sbr.rel target = $region111
                $region116: #{_mlp_forward.1} parent=101 // loop_exit
                  _
              $region102: #{_mlp_forward.1} parent=79 // pred_fallthru
                _
              // Predicated region
              $region117: #{_mlp_forward.1} parent=79 // pred_check
                _
              $region118: #{_mlp_forward.1} parent=79 // pred_check_branch
                %992 = sbr.rel target = $region120
              $region119: #{_mlp_forward.1} parent=79 // pred_region
                _
              $region120: #{_mlp_forward.1} parent=79 // pred_fallthru
                _
            $region80: #{_mlp_forward.1} parent=75 // pred_fallthru
              _
            // Predicated region
            $region81: #{_mlp_forward.1} parent=75 // pred_check
              _
            $region82: #{_mlp_forward.1} parent=75 // pred_check_branch
              %887 = sbr.rel target = $region84
            $region83: #{_mlp_forward.1} parent=75 // pred_region
              %s889 = sshrl.u32 %s876, 2
              // While loop
              $region85: #{_mlp_forward.1} parent=83 // loop_pre_header
                _
              $region86: #{_mlp_forward.1} parent=83 // loop_header
                %s891 = sphi 0, %s893
                %p892 = scmp.ge.s32.totalorder %s891, %s889
                %s896 = sphi 0, %s909
                %s897 = sphi %s869, %s912
                %s898 = sphi %s880, %s913
              $region87: #{_mlp_forward.1} parent=83 // loop_header_branch
                %895 = sbr.rel (%p892) target = $region91
              $region88: #{_mlp_forward.1} parent=83 // loop_body
                %v899 = vld [vmem:[%s897] sm:$0xff]
                %900 = vst [vmem:[%s898] sm:$0xff] %v899
                %v901 = vld [vmem:[%s897 + $0x8] sm:$0xff]
                %902 = vst [vmem:[%s898 + $0x8] sm:$0xff] %v901
                %v903 = vld [vmem:[%s897 + $0x10] sm:$0xff]
                %904 = vst [vmem:[%s898 + $0x10] sm:$0xff] %v903
                %v905 = vld [vmem:[%s897 + $0x18] sm:$0xff]
                %906 = vst [vmem:[%s898 + $0x18] sm:$0xff] %v905
                %s907 = sadd.s32 1, %s896
                %p908 = scmp.ge.s32.totalorder %s907, %s889
                %s909 = scalar_select %p908, 0, %s907
                %s910 = smul.u32 %s909, 32
                %s911 = smul.u32 %s909, 32
                %s912 = scalar_lea.vmem %s869, %s910 [#allocation7]
                %s913 = scalar_lea.vmem %s880, %s911
              $region89: #{_mlp_forward.1} parent=83 // loop_footer
                %s893 = sadd.s32 %s891, 1
              $region90: #{_mlp_forward.1} parent=83 // loop_footer_branch
                %890 = sbr.rel target = $region86
              $region91: #{_mlp_forward.1} parent=83 // loop_exit
                _
              %s914 = sshrl.u32 %s876, 2
              %s915 = sand.u32 %s876, 3
              %s916 = smul.u32 %s914, 4
              %s917 = smul.u32 8, %s916
              %s918 = scalar_lea.vmem %s869, %s917 [#allocation7]
              %s919 = smul.u32 8, %s916
              %s920 = scalar_lea.vmem %s880, %s919
              // While loop
              $region92: #{_mlp_forward.1} parent=83 // loop_pre_header
                _
              $region93: #{_mlp_forward.1} parent=83 // loop_header
                %s922 = sphi 0, %s924
                %p923 = scmp.ge.s32.totalorder %s922, %s915
                %s927 = sphi 0, %s934
                %s928 = sphi %s918, %s937
                %s929 = sphi %s920, %s938
              $region94: #{_mlp_forward.1} parent=83 // loop_header_branch
                %926 = sbr.rel (%p923) target = $region98
              $region95: #{_mlp_forward.1} parent=83 // loop_body
                %v930 = vld [vmem:[%s928] sm:$0xff]
                %931 = vst [vmem:[%s929] sm:$0xff] %v930
                %s932 = sadd.s32 1, %s927
                %p933 = scmp.ge.s32.totalorder %s932, %s915
                %s934 = scalar_select %p933, 0, %s932
                %s935 = smul.u32 %s934, 8
                %s936 = smul.u32 %s934, 8
                %s937 = scalar_lea.vmem %s918, %s935 [#allocation7]
                %s938 = scalar_lea.vmem %s920, %s936
              $region96: #{_mlp_forward.1} parent=83 // loop_footer
                %s924 = sadd.s32 %s922, 1
              $region97: #{_mlp_forward.1} parent=83 // loop_footer_branch
                %921 = sbr.rel target = $region93
              $region98: #{_mlp_forward.1} parent=83 // loop_exit
                _
            $region84: #{_mlp_forward.1} parent=75 // pred_fallthru
              _
          $region76: #{_mlp_forward.1} parent=71 // pred_fallthru
            _
          %993 = vnop
        $region72: #{_mlp_forward.1} parent=55 // pred_fallthru
          _
      $region56: #{_mlp_forward.1} parent=5 // pred_fallthru
        _
      %p994 = scmp.le.s32.totalorder 2, %s17
      // Predicated region
      $region121: #{_mlp_forward.1} parent=5 // pred_check
        %p995 = pneg %p994
      $region122: #{_mlp_forward.1} parent=5 // pred_check_branch
        %997 = sbr.rel (%p995) target = $region124
      $region123: #{_mlp_forward.1} parent=5 // pred_region
        %s998 = ssub.s32 %s17, 2
        // Predicated region
        $region125: #{_mlp_forward.1} parent=123 // pred_check
          %p999 = pneg %p240
        $region126: #{_mlp_forward.1} parent=123 // pred_check_branch
          %1001 = sbr.rel (%p999) target = $region128
        $region127: #{_mlp_forward.1} parent=123 // pred_region
          %s1002 = sand.u32 %s225, 1
          %s1003 = sand.u32 %s225, 1
          %s1004 = smul.addr %s1003, 32
          %s1005 = scalar_lea.vmem [#allocation7], %s1004
        $region128: #{_mlp_forward.1} parent=123 // pred_fallthru
          _
      $region124: #{_mlp_forward.1} parent=5 // pred_fallthru
        _
    $region6: #{_mlp_forward.1} parent=1 // loop_footer
      %s21 = sadd.s32 1, %s17
    $region7: #{_mlp_forward.1} parent=1 // loop_footer_branch
      %16 = sbr.rel target = $region3
    $region8: #{_mlp_forward.1} parent=1 // loop_exit
      _
    %1006 = vsyncpa [#allocation3], 1
    %s1007 = scalar_lea.sflag [#allocation3], 1
    %1008 = vsyncpa %s1007, 1
    %1009 = vsyncpa [#allocation5], 1

</llo_original>
